<compile_context>
chip_gen: v7x
topology: tpu7x:2x2x1
jax: 0.10.0
libtpu: 0.0.40
codegen_flags: <defaults>
</compile_context>

<pallas_src>
import math

import jax
import jax.numpy as jnp
from jax.experimental import pallas as pl
from jax.experimental.pallas import tpu as pltpu


# ~6 MiB blocks: 2 buffers x (x + pos + out) x 6 MiB ~= 36 MiB (+ headroom)
# fits v7x's 64 MiB physical VMEM and is large enough that the ~0.35 us
# per-grid-step overhead is <10% even at v7x's 3.2 TB/s HBM.
_TARGET_BLOCK_BYTES = 6 * 1024 * 1024
_VMEM_HEADROOM_BYTES = 4 * 1024 * 1024


def _add_pos_kernel(x_ref, pos_ref, o_ref):
    # Sequence-tiled path: all refs are the same (ts, H) tile -> a pure
    # vld/vld/vadd/vst stream (no convert, no broadcast).
    # Batch-tiled path: x/o are (tb, S, H), pos is (S, H); the leading-dim
    # broadcast costs nothing on the VPU (no cross-lane movement).
    o_ref[...] = x_ref[...] + pos_ref[...]


def _sublane_multiple(dtype) -> int:
    # f32 -> 8, bf16/f16 -> 16, int8/fp8 -> 32 (packed-sublane row pairs/quads).
    itemsize = jnp.dtype(dtype).itemsize
    return 8 * max(1, 4 // itemsize)


def _cost(B, S, H, itemsize):
    return pl.CostEstimate(
        flops=B * S * H,
        transcendentals=0,
        bytes_accessed=(2 * B * S * H + S * H) * itemsize,
    )


def _vmem_limit(per_step_block_bytes):
    # Inputs and outputs are double-buffered by the Pallas pipeline.
    return int(2 * per_step_block_bytes + _VMEM_HEADROOM_BYTES)


def _add_pos_batch_tiled(x, pos, target_block_bytes, donate_x):
    """Small (S, H) plane: tile over batch, keep the full pos table resident."""
    B, S, H = x.shape
    itemsize = jnp.dtype(x.dtype).itemsize
    plane = S * H * itemsize

    tb = max(1, min(B, target_block_bytes // max(plane, 1)))
    while tb > 1 and B % tb != 0:   # prefer tb that divides B (no masked tail)
        tb -= 1
    n_b = pl.cdiv(B, tb)

    block_bytes = (2 * tb + 1) * plane   # x block + out block + pos block
    return pl.pallas_call(
        _add_pos_kernel,
        out_shape=jax.ShapeDtypeStruct((B, S, H), x.dtype),
        grid_spec=pltpu.PrefetchScalarGridSpec(
            num_scalar_prefetch=0,
            grid=(n_b,),
            in_specs=[
                pl.BlockSpec((tb, S, H), lambda b: (b, 0, 0)),
                # Constant block index -> the table is DMA'd from HBM once and
                # stays resident in VMEM across the whole batch loop.
                pl.BlockSpec((S, H), lambda b: (0, 0)),
            ],
            out_specs=pl.BlockSpec((tb, S, H), lambda b: (b, 0, 0)),
        ),
        compiler_params=pltpu.CompilerParams(
            dimension_semantics=("parallel",),
            vmem_limit_bytes=_vmem_limit(block_bytes),
        ),
        cost_estimate=_cost(B, S, H, itemsize),
        input_output_aliases=({0: 0} if donate_x else {}),
    )(x, pos)


def _add_pos_seq_tiled(x, pos, target_block_bytes, donate_x):
    """Large (S, H) plane: tile rows of S, batch as the inner grid axis."""
    B, S, H = x.shape
    itemsize = jnp.dtype(x.dtype).itemsize
    sub = _sublane_multiple(x.dtype)
    row_bytes = H * itemsize

    ts = max(sub, (target_block_bytes // max(row_bytes, 1)) // sub * sub)
    if ts >= S:
        ts = S  # full-extent block along S is always layout-legal
    elif S % ts != 0:
        # Prefer a tile height that divides S (no masked partial last tile),
        # but never shrink below half the bandwidth-optimal size.
        t = ts
        while t >= max(sub, ts // 2):
            if S % t == 0:
                ts = t
                break
            t -= sub
    n_s = pl.cdiv(S, ts)

    block_bytes = 3 * ts * H * itemsize   # x tile + pos tile + out tile
    return pl.pallas_call(
        _add_pos_kernel,
        out_shape=jax.ShapeDtypeStruct((B, S, H), x.dtype),
        grid_spec=pltpu.PrefetchScalarGridSpec(
            num_scalar_prefetch=0,
            # S-tile axis OUTER, batch INNER: the pos block index depends only
            # on the outer axis, so Pallas skips its DMA across the inner batch
            # loop and the table is read from HBM only once per S-tile.
            grid=(n_s, B),
            in_specs=[
                pl.BlockSpec((pl.Squeezed(), ts, H), lambda s, b: (b, s, 0)),
                pl.BlockSpec((ts, H), lambda s, b: (s, 0)),
            ],
            out_specs=pl.BlockSpec((pl.Squeezed(), ts, H), lambda s, b: (b, s, 0)),
        ),
        compiler_params=pltpu.CompilerParams(
            dimension_semantics=("parallel", "parallel"),
            vmem_limit_bytes=_vmem_limit(block_bytes),
        ),
        cost_estimate=_cost(B, S, H, itemsize),
        input_output_aliases=({0: 0} if donate_x else {}),
    )(x, pos)


def _add_pos_impl(x, pos, target_block_bytes, donate_x):
    B, S, H = x.shape
    itemsize = jnp.dtype(x.dtype).itemsize
    plane_bytes = S * H * itemsize
    if plane_bytes <= target_block_bytes:
        return _add_pos_batch_tiled(x, pos, target_block_bytes, donate_x)
    return _add_pos_seq_tiled(x, pos, target_block_bytes, donate_x)


def add_position_embeddings(
    x: jax.Array,
    pos: jax.Array,
    *,
    target_block_bytes: int = _TARGET_BLOCK_BYTES,
    donate_x: bool = False,
) -> jax.Array:
    """x: (B, S, H), pos: (S, H) -> (B, S, H) = x + pos (broadcast over batch)."""
    B, S, H = x.shape
    assert pos.shape == (S, H)

    # Table is rounded to the activation dtype before the add (behaves as a
    # table stored in the model dtype; constant-folded under jit).
    pos = pos.astype(x.dtype)

    # Narrow H: fold (S, H) into lane-dense rows of exactly 128 ONLY when no
    # padding is needed — jnp.pad + a trailing slice would each cost a full
    # extra HBM pass over x, which is worse than masked partial stores.
    if H % 128 != 0 and (S * H) % 128 == 0:
        R = (S * H) // 128
        out = _add_pos_impl(
            x.reshape(B, R, 128), pos.reshape(R, 128), target_block_bytes, donate_x
        )
        return out.reshape(B, S, H)

    # TODO(synk): when H % 128 != 0 and S*H % 128 != 0 the 3-D path below keeps
    #             H as a full-extent block; the lane tail uses masked stores,
    #             which is still cheaper than padding for a mem-bound add.
    return _add_pos_impl(x, pos, target_block_bytes, donate_x)


def make_sinusoidal_table(seq_len: int, hidden: int, dtype=jnp.float32) -> jax.Array:
    """Deterministic sinusoidal positional-embedding table of shape (seq, hidden)."""
    position = jnp.arange(seq_len, dtype=jnp.float32)[:, None]            # (S, 1)
    div_term = jnp.exp(
        jnp.arange(0, hidden, 2, dtype=jnp.float32)
        * (-math.log(10000.0) / hidden)
    )                                                                      # (H/2,)
    angles = position * div_term[None, :]                                  # (S, H/2)
    table = jnp.zeros((seq_len, hidden), dtype=jnp.float32)
    table = table.at[:, 0::2].set(jnp.sin(angles))
    table = table.at[:, 1::2].set(jnp.cos(angles))
    return table.astype(dtype)


if __name__ == "__main__":
    key = jax.random.PRNGKey(0)
    k1, k2 = jax.random.split(key)

    # --- 1) Small demo shape consistent with the module: batch=2, seq=8, hidden=32.
    #        H=32 is not lane-dense but S*H=256 is a multiple of 128, so this
    #        exercises the pad-free fold path + batch-tiled kernel.
    B, S, H = 2, 8, 32
    x = jax.random.normal(key, (B, S, H), dtype=jnp.float32)
    pos = make_sinusoidal_table(S, H, dtype=jnp.float32)

    out = add_position_embeddings(x, pos)
    out = jax.block_until_ready(out)

    ref = x + pos[None, :, :]
    assert out.shape == (B, S, H)
    assert out.dtype == x.dtype
    assert jnp.allclose(out, ref, atol=1e-6, rtol=1e-6)

    # --- 2) Lane-dense bf16 activations (H=128): batch-tiled path, table rounded
    #        to bf16 before the add.
    B2, S2, H2 = 2, 16, 128
    x2 = jax.random.normal(k1, (B2, S2, H2), dtype=jnp.bfloat16)
    pos2 = make_sinusoidal_table(S2, H2, dtype=jnp.float32)

    out2 = add_position_embeddings(x2, pos2)
    out2 = jax.block_until_ready(out2)

    ref2 = x2 + pos2.astype(jnp.bfloat16)[None, :, :]
    assert out2.shape == (B2, S2, H2)
    assert out2.dtype == x2.dtype
    assert jnp.allclose(
        out2.astype(jnp.float32), ref2.astype(jnp.float32), atol=1e-2, rtol=1e-2
    )

    # --- 3) Force the sequence-tiled path at small shapes by shrinking the
    #        block target (exercises the (n_s outer, B inner) grid + Squeezed
    #        batch dim without needing a large array).
    B3, S3, H3 = 2, 64, 256
    x3 = jax.random.normal(k2, (B3, S3, H3), dtype=jnp.float32)
    pos3 = make_sinusoidal_table(S3, H3, dtype=jnp.float32)

    out3 = add_position_embeddings(x3, pos3, target_block_bytes=16 * 1024)
    out3 = jax.block_until_ready(out3)

    ref3 = x3 + pos3[None, :, :]
    assert out3.shape == (B3, S3, H3)
    assert out3.dtype == x3.dtype
    assert jnp.allclose(out3, ref3, atol=1e-6, rtol=1e-6)

    print("KERNEL_OK")
</pallas_src>

<mosaic_0001>
module attributes {stable_mosaic.version = 11 : i64} {
  func.func @_add_pos_kernel(%arg0: i32, %arg1: memref<2x2x128xf32, #tpu.memory_space<vmem>>, %arg2: memref<2x128xf32, #tpu.memory_space<vmem>>, %arg3: memref<2x2x128xf32, #tpu.memory_space<vmem>>) attributes {dimension_semantics = [#tpu.dimension_semantics<parallel>], iteration_bounds = array<i64: 1>, scalar_prefetch = 0 : i64, scratch_operands = 0 : i64, tpu.core_type = #tpu.core_type<tc>, window_params = [{transform_indices = @transform_0, window_bounds = array<i64: 2, 2, 128>}, {pipeline_mode = #tpu.pipeline_mode<synchronous>, transform_indices = @transform_1, window_bounds = array<i64: 2, 128>}, {transform_indices = @transform_2, window_bounds = array<i64: 2, 2, 128>}]} {
    %c0 = arith.constant 0 : index
    %c0_0 = arith.constant 0 : index
    %c0_1 = arith.constant 0 : index
    %0 = vector.load %arg1[%c0, %c0_0, %c0_1] : memref<2x2x128xf32, #tpu.memory_space<vmem>>, vector<2x2x128xf32>
    %c0_2 = arith.constant 0 : index
    %c0_3 = arith.constant 0 : index
    %1 = vector.load %arg2[%c0_2, %c0_3] : memref<2x128xf32, #tpu.memory_space<vmem>>, vector<2x128xf32>
    %2 = vector.shape_cast %1 : vector<2x128xf32> to vector<1x2x128xf32>
    %3 = vector.broadcast %2 : vector<1x2x128xf32> to vector<2x2x128xf32>
    %4 = arith.addf %0, %3 : vector<2x2x128xf32>
    %c0_4 = arith.constant 0 : index
    %c0_5 = arith.constant 0 : index
    %c0_6 = arith.constant 0 : index
    %5 = vector.load %arg3[%c0_4, %c0_5, %c0_6] : memref<2x2x128xf32, #tpu.memory_space<vmem>>, vector<2x2x128xf32>
    tpu.vector_store %arg3[%c0_4, %c0_5, %c0_6], %4 {strides = array<i32>} : memref<2x2x128xf32, #tpu.memory_space<vmem>>, vector<2x2x128xf32>,
    return
  }
  func.func @transform_0(%arg0: i32) -> (i32, i32, i32) {
    %c0_i32 = arith.constant 0 : i32
    %c0_i32_0 = arith.constant 0 : i32
    %c0_i32_1 = arith.constant 0 : i32
    return %arg0, %c0_i32, %c0_i32_0 : i32, i32, i32
  }
  func.func @transform_1(%arg0: i32) -> (i32, i32) {
    %c0_i32 = arith.constant 0 : i32
    %c0_i32_0 = arith.constant 0 : i32
    %c0_i32_1 = arith.constant 0 : i32
    return %c0_i32, %c0_i32_0 : i32, i32
  }
  func.func @transform_2(%arg0: i32) -> (i32, i32, i32) {
    %c0_i32 = arith.constant 0 : i32
    %c0_i32_0 = arith.constant 0 : i32
    %c0_i32_1 = arith.constant 0 : i32
    return %arg0, %c0_i32, %c0_i32_0 : i32, i32, i32
  }
}

</mosaic_0001>

<llo_original>
// kernel: tpu_custom_call.1
$region0: #{tpu_custom_call.1}
  #allocation0 [shape = 'u32[]', space=smem, size = 0x4, offset = 0x4, fixed_abs, tag = 'smem constant byte address 0x4 - core index']
  #allocation1 [shape = 'u32[144,128]{1,0:T(1,128)}', space=vmem, size = 0x12000, scoped, tag = 'internal scratch']
  %s0 = inlined_call_operand.hbm [shape: f32[2,2,128], index: 0, kind: input, shape index: {}]
  %s1 = inlined_call_operand.vmem [shape: f32[2,128], index: 1, kind: input, shape index: {}]
  %s2 = inlined_call_operand.hbm [shape: f32[2,2,128], index: 2, kind: output, shape index: {}]
  %s3 = sld [smem:[#allocation0]]
  $region22: #{tpu_custom_call.1} parent=0
    _
  %s5 = ssub.s32 1, %s3
  %s6 = scalar_select 0, %s5, %s3
  $region1: #{tpu_custom_call.1} parent=0
    #allocation2 [shape = 'u8[2048]{0}', space=vmem, size = 0x800, scoped, tag = 'input window, operand 0, single buffered']
    #allocation3 [shape = 's32[1]{0}', space=sflag, size = 0x4, scoped, tag = 'scoped memory for tpu_custom_call.1']
    #allocation4 [shape = 's32[1]{0}', space=sflag, size = 0x4, scoped, tag = 'scoped memory for tpu_custom_call.1']
    #allocation5 [shape = 'u8[2048]{0}', space=vmem, size = 0x800, scoped, tag = 'output window, operand 0, single buffered']
    %7 = vsyncpa [#allocation3], 0
    %8 = vsyncpa [#allocation4], 0
    // Predicated region
    $region2: #{tpu_custom_call.1} parent=1 // pred_check
      _
    $region3: #{tpu_custom_call.1} parent=1 // pred_check_branch
      %10 = sbr.rel (0) target = $region5
    $region4: #{tpu_custom_call.1} parent=1 // pred_region
      %s12 = ssub.s32 64, 64
      %13 = vsyncadd [#allocation3], %s12
      %s14 = sshll.u32 [#allocation2], 4
      %s15 = int_to_ptr.vmem [resolvable:$true] %s14
      %20 = dma.hbm_to_vmem [thread:$0]  %s0, 64, %s15, [#allocation3], 32, 32, 2
    $region5: #{tpu_custom_call.1} parent=1 // pred_fallthru
      _
    // Predicated region
    $region6: #{tpu_custom_call.1} parent=1 // pred_check
      _
    $region7: #{tpu_custom_call.1} parent=1 // pred_check_branch
      %22 = sbr.rel (0) target = $region9
    $region8: #{tpu_custom_call.1} parent=1 // pred_region
      _
    $region9: #{tpu_custom_call.1} parent=1 // pred_fallthru
      _
    // Predicated region
    $region10: #{tpu_custom_call.1} parent=1 // pred_check
      _
    $region11: #{tpu_custom_call.1} parent=1 // pred_check_branch
      %24 = sbr.rel (0) target = $region13
    $region12: #{tpu_custom_call.1} parent=1 // pred_region
      %25 = dma.done [#allocation3], 64
    $region13: #{tpu_custom_call.1} parent=1 // pred_fallthru
      _
    %v26 = vld [vmem:[#allocation2] sm:$0x3]
    %v27 = vld [vmem:[#allocation2 + $0x2] sm:$0x3]
    %v28 = vld [vmem:[%s1] sm:$0x3]
    %v29 = vadd.f32 %v26, %v28
    %v30 = vadd.f32 %v27, %v28
    %31 = vst [vmem:[#allocation5] sm:$0x3] %v29
    %32 = vst [vmem:[#allocation5 + $0x2] sm:$0x3] %v30
    // Predicated region
    $region14: #{tpu_custom_call.1} parent=1 // pred_check
      _
    $region15: #{tpu_custom_call.1} parent=1 // pred_check_branch
      %34 = sbr.rel (0) target = $region17
    $region16: #{tpu_custom_call.1} parent=1 // pred_region
      %s36 = ssub.s32 64, 64
      %37 = vsyncadd [#allocation4], %s36
      %s38 = sshll.u32 [#allocation5], 4
      %s39 = int_to_ptr.vmem [resolvable:$true] %s38
      %44 = dma.vmem_to_hbm [thread:$0]  %s39, 64, %s2, [#allocation4], 32, 32, 2
    $region17: #{tpu_custom_call.1} parent=1 // pred_fallthru
      _
    // Predicated region
    $region18: #{tpu_custom_call.1} parent=1 // pred_check
      _
    $region19: #{tpu_custom_call.1} parent=1 // pred_check_branch
      %46 = sbr.rel (0) target = $region21
    $region20: #{tpu_custom_call.1} parent=1 // pred_region
      %47 = dma.done [#allocation4], 64
    $region21: #{tpu_custom_call.1} parent=1 // pred_fallthru
      _
    %48 = vsyncpa [#allocation3], 1
    %49 = vsyncpa [#allocation4], 1

</llo_original>
